<compile_context>
chip_gen: v6e
topology: v6e:2x2x1
jax: 0.10.0
libtpu: 0.0.40
codegen_flags: <defaults>
</compile_context>

<pallas_src>
import functools

import jax
import jax.numpy as jnp
from jax import lax
from jax.experimental import pallas as pl
from jax.experimental.pallas import tpu as pltpu

LANES = 128
SUBLANES = 8
# Inner-loop chunk (rows) processed per iteration inside one grid step.
# Bounds in-kernel f32 temporaries to ~0.5 MiB however big the HBM tile is.
CHUNK_ROWS = 256
# ~4 MiB of native-dtype input per pipeline buffer (dtype-aware). 2 inputs x
# 2 buffers = 16 MiB, under the 32 MiB scoped-VMEM limit set explicitly below.
DEFAULT_TILE_BYTES = 4 * 1024 * 1024
# Below this element count, fixed pallas_call / pipeline spin-up dominates.
DEFAULT_SMALL_N = 256 * 1024
# Leading "parallel" grid axis: splits the row range across the two
# TensorCores on v7x; harmless (serial) on 1-TC v5e/v6e.
NUM_CORES = 2


def _iou_sums_kernel(x_ref, y_ref, int_ref, tot_ref, *,
                     row_tile, valid_rows, steps_per_core, needs_mask):
    c = pl.program_id(0)          # core slot ("parallel")
    i = pl.program_id(1)          # block step within this core ("arbitrary")

    @pl.when(i == 0)
    def _():
        int_ref[...] = jnp.zeros_like(int_ref)
        tot_ref[...] = jnp.zeros_like(tot_ref)

    # Global (unclamped) row offset this step owns; the input index_map clamps
    # the DMA'd block, the mask below zeroes anything outside [0, valid_rows).
    block_row0 = (c * steps_per_core + i) * row_tile
    n_chunks = row_tile // CHUNK_ROWS
    groups = CHUNK_ROWS // SUBLANES

    def accumulate(masked):
        @pl.loop(0, n_chunks)
        def _(g):
            r0 = pl.multiple_of(g * CHUNK_ROWS, CHUNK_ROWS)
            x = x_ref[pl.ds(r0, CHUNK_ROWS), :].astype(jnp.float32)
            y = y_ref[pl.ds(r0, CHUNK_ROWS), :].astype(jnp.float32)
            if masked:
                row = (block_row0 + r0
                       + lax.broadcasted_iota(jnp.int32, (CHUNK_ROWS, 1), 0))
                valid = row < valid_rows
                # Select (NOT multiply-by-mask): garbage/NaN rows in partial
                # or out-of-range blocks must not propagate into the sums.
                x = jnp.where(valid, x, 0.0)
                y = jnp.where(valid, y, 0.0)
            # Fold each chunk to one (8,128) vreg per accumulator: pure VPU
            # adds; both reductions consume the same loaded chunk (one pass).
            int_ref[...] += (x * y).reshape(groups, SUBLANES, LANES).sum(axis=0)
            tot_ref[...] += (x + y).reshape(groups, SUBLANES, LANES).sum(axis=0)

    if needs_mask:
        # Only partial / fully-out-of-range blocks pay the mask cost.
        @pl.when(block_row0 + row_tile <= valid_rows)
        def _():
            accumulate(False)

        @pl.when(block_row0 + row_tile > valid_rows)
        def _():
            accumulate(True)
    else:
        accumulate(False)


def _iou_partial_sums(x2d, y2d, *, row_tile, num_cores, steps_per_core,
                      needs_mask):
    """Per-core (8,128) f32 partial-sum slabs for sum(x*y) and sum(x+y)."""
    rows = x2d.shape[0]
    itemsize = max(x2d.dtype.itemsize, y2d.dtype.itemsize)
    nblocks = pl.cdiv(rows, row_tile)
    last_block = nblocks - 1

    def in_map(c, i):
        # Clamp so trailing out-of-range steps re-read the last block (Pallas
        # dedupes the DMA); the kernel masks those rows to zero anyway.
        return (jnp.minimum(c * steps_per_core + i, last_block), 0)

    kernel = functools.partial(
        _iou_sums_kernel, row_tile=row_tile, valid_rows=rows,
        steps_per_core=steps_per_core, needs_mask=needs_mask)

    cost = pl.CostEstimate(
        flops=3 * rows * LANES,
        transcendentals=0,
        bytes_accessed=(2 * rows * LANES * itemsize
                        + 2 * num_cores * SUBLANES * LANES * 4))

    return pl.pallas_call(
        kernel,
        out_shape=(
            jax.ShapeDtypeStruct((num_cores * SUBLANES, LANES), jnp.float32),
            jax.ShapeDtypeStruct((num_cores * SUBLANES, LANES), jnp.float32),
        ),
        grid_spec=pltpu.PrefetchScalarGridSpec(
            num_scalar_prefetch=0,
            grid=(num_cores, steps_per_core),
            in_specs=[
                pl.BlockSpec((row_tile, LANES), in_map),
                pl.BlockSpec((row_tile, LANES), in_map),
            ],
            out_specs=[
                pl.BlockSpec((SUBLANES, LANES), lambda c, i: (c, 0)),
                pl.BlockSpec((SUBLANES, LANES), lambda c, i: (c, 0)),
            ],
        ),
        compiler_params=pltpu.CompilerParams(
            dimension_semantics=("parallel", "arbitrary"),
            # 16 MiB of double-buffered inputs + ~0.5 MiB temps; raise v5e's
            # 16 MiB default explicitly (safe on v6e/v7x defaults too).
            vmem_limit_bytes=32 * 1024 * 1024,
        ),
        cost_estimate=cost,
    )(x2d, y2d)


def _finalize(intersection, total, smooth):
    union = total - intersection
    smooth = jnp.asarray(smooth, dtype=jnp.float32)
    iou = (intersection + smooth) / (union + smooth)
    return jnp.float32(1.0) - iou


def _pick_row_tile(rows, itemsize, max_tile_bytes):
    # Dtype-aware: rows per HBM tile targeting max_tile_bytes per buffer,
    # a multiple of CHUNK_ROWS, and no larger than needed to cover `rows`.
    tile = max(max_tile_bytes // (LANES * itemsize), CHUNK_ROWS)
    tile = (tile // CHUNK_ROWS) * CHUNK_ROWS
    needed = ((rows + CHUNK_ROWS - 1) // CHUNK_ROWS) * CHUNK_ROWS
    return min(tile, needed)


@functools.partial(jax.jit,
                   static_argnames=("max_tile_bytes", "small_n_threshold"))
def iou_loss(inputs, targets, smooth=1.0, *,
             max_tile_bytes=DEFAULT_TILE_BYTES,
             small_n_threshold=DEFAULT_SMALL_N):
    """Pallas-TPU IoU loss (1 - IoU). Returns a scalar float32."""
    x = jnp.ravel(inputs)
    y = jnp.ravel(targets)
    n = x.shape[0]
    n_bulk = (n // LANES) * LANES

    if n <= small_n_threshold or n_bulk == 0:
        # Small-n fast path: kernel fixed costs would dominate.
        xf = x.astype(jnp.float32)
        yf = y.astype(jnp.float32)
        return _finalize(jnp.sum(xf * yf), jnp.sum(xf + yf), smooth)

    # <=127-element ragged tail handled with tiny jnp sums (replaces the old
    # jnp.pad, which forced a full extra HBM copy of BOTH inputs).
    tail_int = jnp.float32(0.0)
    tail_tot = jnp.float32(0.0)
    if n_bulk != n:
        # TODO(synk): the bulk prefix slice below may still materialize one
        # copy on unaligned shapes; a fully copy-free tail needs a manual-DMA
        # kernel over the raw 1-D HBM ref. Aligned shapes (the common case)
        # are copy-free bitcasts.
        xt = x[n_bulk:].astype(jnp.float32)
        yt = y[n_bulk:].astype(jnp.float32)
        tail_int = jnp.sum(xt * yt)
        tail_tot = jnp.sum(xt + yt)

    rows = n_bulk // LANES
    x2d = x[:n_bulk].reshape(rows, LANES)
    y2d = y[:n_bulk].reshape(rows, LANES)

    itemsize = max(x2d.dtype.itemsize, y2d.dtype.itemsize)
    row_tile = _pick_row_tile(rows, itemsize, max_tile_bytes)
    nblocks = pl.cdiv(rows, row_tile)
    num_cores = min(NUM_CORES, nblocks)
    steps_per_core = pl.cdiv(nblocks, num_cores)
    needs_mask = (num_cores * steps_per_core * row_tile) != rows

    part_int, part_tot = _iou_partial_sums(
        x2d, y2d, row_tile=row_tile, num_cores=num_cores,
        steps_per_core=steps_per_core, needs_mask=needs_mask)

    intersection = jnp.sum(part_int) + tail_int
    total = jnp.sum(part_tot) + tail_tot
    return _finalize(intersection, total, smooth)


def iou_loss_ref(inputs, targets, smooth=1.0):
    x = jnp.ravel(inputs).astype(jnp.float32)
    y = jnp.ravel(targets).astype(jnp.float32)
    intersection = jnp.sum(x * y)
    total = jnp.sum(x + y)
    union = total - intersection
    return 1.0 - (intersection + smooth) / (union + smooth)


if __name__ == "__main__":
    key = jax.random.PRNGKey(0)

    def make_inputs(k, shape, dtype=jnp.float32):
        k1, k2 = jax.random.split(k)
        preds = jax.nn.sigmoid(jax.random.normal(k1, shape, dtype=jnp.float32))
        targs = (jax.random.uniform(k2, shape) > 0.5)
        return preds.astype(dtype), targs.astype(dtype)

    def check(name, loss, ref, rtol=1e-5, atol=1e-6):
        loss = jax.block_until_ready(loss)
        assert jnp.allclose(loss, ref, rtol=rtol, atol=atol), (name, loss, ref)

    keys = jax.random.split(key, 6)

    # 1) Main NCHW segmentation case; force the kernel path (single block,
    #    in-kernel row mask since 16 rows < one 256-row chunk).
    p, t = make_inputs(keys[0], (2, 4, 16, 16))
    check("nchw", iou_loss(p, t, smooth=1.0, small_n_threshold=0),
          iou_loss_ref(p, t, 1.0))

    # 2) Unaligned element count: exercises the jnp tail + kernel bulk path.
    p, t = make_inputs(keys[1], (3, 5, 7, 11))
    check("unaligned", iou_loss(p, t, smooth=1.0, small_n_threshold=0),
          iou_loss_ref(p, t, 1.0))

    # 3) Multi-step grid + two-core split, rows divide evenly (no mask).
    p, t = make_inputs(keys[2], (2, 4, 128, 128))
    check("multistep", iou_loss(p, t, smooth=1.0, small_n_threshold=0,
                                max_tile_bytes=CHUNK_ROWS * LANES * 4),
          iou_loss_ref(p, t, 1.0), rtol=1e-4)

    # 4) Two-core split with a partial (masked) last block on core 1.
    p, t = make_inputs(keys[3], (2, 3, 80, 128))
    check("partial", iou_loss(p, t, smooth=1.0, small_n_threshold=0,
                              max_tile_bytes=CHUNK_ROWS * LANES * 4),
          iou_loss_ref(p, t, 1.0), rtol=1e-4)

    # 5) bf16 inputs: dtype-aware tile sizing, f32 accumulation in-kernel.
    p, t = make_inputs(keys[4], (2, 4, 128, 128), dtype=jnp.bfloat16)
    check("bf16", iou_loss(p, t, smooth=1.0, small_n_threshold=0),
          iou_loss_ref(p, t, 1.0), rtol=1e-3, atol=1e-4)

    # 6) Small-n fast path (default threshold; skips Pallas entirely).
    p, t = make_inputs(keys[5], (2, 4, 16, 16))
    check("fastpath", iou_loss(p, t, smooth=1.0), iou_loss_ref(p, t, 1.0))

    print("KERNEL_OK")
</pallas_src>

<mosaic_0001>
module attributes {stable_mosaic.version = 11 : i64} {
  func.func @_iou_sums_kernel(%arg0: i32, %arg1: i32, %arg2: memref<256x128xf32, #tpu.memory_space<vmem>>, %arg3: memref<256x128xf32, #tpu.memory_space<vmem>>, %arg4: memref<8x128xf32, #tpu.memory_space<vmem>>, %arg5: memref<8x128xf32, #tpu.memory_space<vmem>>) attributes {dimension_semantics = [#tpu.dimension_semantics<parallel>, #tpu.dimension_semantics<arbitrary>], iteration_bounds = array<i64: 1, 1>, scalar_prefetch = 0 : i64, scratch_operands = 0 : i64, tpu.core_type = #tpu.core_type<tc>, window_params = [{transform_indices = @transform_0, window_bounds = array<i64: 256, 128>}, {transform_indices = @transform_1, window_bounds = array<i64: 256, 128>}, {transform_indices = @transform_2, window_bounds = array<i64: 8, 128>}, {transform_indices = @transform_3, window_bounds = array<i64: 8, 128>}]} {
    %c0_i32 = arith.constant 0 : i32
    %0 = arith.cmpi eq, %arg1, %c0_i32 : i32
    %1 = arith.extui %0 : i1 to i32
    %c0_i32_0 = arith.constant 0 : i32
    %2 = arith.cmpi ne, %1, %c0_i32_0 : i32
    scf.if %2 {
      %cst = arith.constant 0.000000e+00 : f32
      %14 = vector.broadcast %cst : f32 to vector<8x128xf32>
      %c0 = arith.constant 0 : index
      %c0_6 = arith.constant 0 : index
      %15 = vector.load %arg4[%c0, %c0_6] : memref<8x128xf32, #tpu.memory_space<vmem>>, vector<8x128xf32>
      tpu.vector_store %arg4[%c0, %c0_6], %14 {strides = array<i32>} : memref<8x128xf32, #tpu.memory_space<vmem>>, vector<8x128xf32>,
      %cst_7 = arith.constant 0.000000e+00 : f32
      %16 = vector.broadcast %cst_7 : f32 to vector<8x128xf32>
      %c0_8 = arith.constant 0 : index
      %c0_9 = arith.constant 0 : index
      %17 = vector.load %arg5[%c0_8, %c0_9] : memref<8x128xf32, #tpu.memory_space<vmem>>, vector<8x128xf32>
      tpu.vector_store %arg5[%c0_8, %c0_9], %16 {strides = array<i32>} : memref<8x128xf32, #tpu.memory_space<vmem>>, vector<8x128xf32>,
    } else {
    }
    %c1_i32 = arith.constant 1 : i32
    %3 = arith.muli %arg0, %c1_i32 : i32
    %4 = arith.addi %3, %arg1 : i32
    %c256_i32 = arith.constant 256 : i32
    %5 = arith.muli %4, %c256_i32 : i32
    %c256_i32_1 = arith.constant 256 : i32
    %6 = arith.addi %5, %c256_i32_1 : i32
    %c16_i32 = arith.constant 16 : i32
    %7 = arith.cmpi sle, %6, %c16_i32 : i32
    %8 = arith.extui %7 : i1 to i32
    %c0_i32_2 = arith.constant 0 : i32
    %9 = arith.cmpi ne, %8, %c0_i32_2 : i32
    scf.if %9 {
      %c0_i32_6 = arith.constant 0 : i32
      %c1_i32_7 = arith.constant 1 : i32
      %14 = arith.muli %c0_i32_6, %c1_i32_7 : i32
      %c0_i32_8 = arith.constant 0 : i32
      %15 = arith.addi %c0_i32_8, %14 : i32
      %c256_i32_9 = arith.constant 256 : i32
      %16 = arith.muli %15, %c256_i32_9 : i32
      %17 = tpu.assume_multiple %16, 256 : i32
      %18 = arith.index_cast %17 : i32 to index
      %c0 = arith.constant 0 : index
      %19 = vector.load %arg2[%18, %c0] : memref<256x128xf32, #tpu.memory_space<vmem>>, vector<256x128xf32>
      %20 = arith.index_cast %17 : i32 to index
      %c0_10 = arith.constant 0 : index
      %21 = vector.load %arg3[%20, %c0_10] : memref<256x128xf32, #tpu.memory_space<vmem>>, vector<256x128xf32>
      %c0_11 = arith.constant 0 : index
      %c0_12 = arith.constant 0 : index
      %22 = vector.load %arg4[%c0_11, %c0_12] : memref<8x128xf32, #tpu.memory_space<vmem>>, vector<8x128xf32>
      %23 = arith.mulf %19, %21 : vector<256x128xf32>
      %24 = vector.shape_cast %23 : vector<256x128xf32> to vector<32x8x128xf32>
      %cst = arith.constant dense<0.000000e+00> : vector<8x128xf32>
      %25 = vector.multi_reduction <add>, %24, %cst [0] : vector<32x8x128xf32> to vector<8x128xf32>
      %26 = arith.addf %22, %25 : vector<8x128xf32>
      %c0_13 = arith.constant 0 : index
      %c0_14 = arith.constant 0 : index
      %27 = vector.load %arg4[%c0_13, %c0_14] : memref<8x128xf32, #tpu.memory_space<vmem>>, vector<8x128xf32>
      tpu.vector_store %arg4[%c0_13, %c0_14], %26 {strides = array<i32>} : memref<8x128xf32, #tpu.memory_space<vmem>>, vector<8x128xf32>,
      %c0_15 = arith.constant 0 : index
      %c0_16 = arith.constant 0 : index
      %28 = vector.load %arg5[%c0_15, %c0_16] : memref<8x128xf32, #tpu.memory_space<vmem>>, vector<8x128xf32>
      %29 = arith.addf %19, %21 : vector<256x128xf32>
      %30 = vector.shape_cast %29 : vector<256x128xf32> to vector<32x8x128xf32>
      %cst_17 = arith.constant dense<0.000000e+00> : vector<8x128xf32>
      %31 = vector.multi_reduction <add>, %30, %cst_17 [0] : vector<32x8x128xf32> to vector<8x128xf32>
      %32 = arith.addf %28, %31 : vector<8x128xf32>
      %c0_18 = arith.constant 0 : index
      %c0_19 = arith.constant 0 : index
      %33 = vector.load %arg5[%c0_18, %c0_19] : memref<8x128xf32, #tpu.memory_space<vmem>>, vector<8x128xf32>
      tpu.vector_store %arg5[%c0_18, %c0_19], %32 {strides = array<i32>} : memref<8x128xf32, #tpu.memory_space<vmem>>, vector<8x128xf32>,
      %c1_i32_20 = arith.constant 1 : i32
    } else {
    }
    %c256_i32_3 = arith.constant 256 : i32
    %10 = arith.addi %5, %c256_i32_3 : i32
    %c16_i32_4 = arith.constant 16 : i32
    %11 = arith.cmpi sgt, %10, %c16_i32_4 : i32
    %12 = arith.extui %11 : i1 to i32
    %c0_i32_5 = arith.constant 0 : i32
    %13 = arith.cmpi ne, %12, %c0_i32_5 : i32
    scf.if %13 {
      %c0_i32_6 = arith.constant 0 : i32
      %c1_i32_7 = arith.constant 1 : i32
      %14 = arith.muli %c0_i32_6, %c1_i32_7 : i32
      %c0_i32_8 = arith.constant 0 : i32
      %15 = arith.addi %c0_i32_8, %14 : i32
      %c256_i32_9 = arith.constant 256 : i32
      %16 = arith.muli %15, %c256_i32_9 : i32
      %17 = tpu.assume_multiple %16, 256 : i32
      %18 = arith.index_cast %17 : i32 to index
      %c0 = arith.constant 0 : index
      %19 = vector.load %arg2[%18, %c0] : memref<256x128xf32, #tpu.memory_space<vmem>>, vector<256x128xf32>
      %20 = arith.index_cast %17 : i32 to index
      %c0_10 = arith.constant 0 : index
      %21 = vector.load %arg3[%20, %c0_10] : memref<256x128xf32, #tpu.memory_space<vmem>>, vector<256x128xf32>
      %22 = arith.addi %5, %17 : i32
      %23 = tpu.iota {dimensions = array<i32: 0>} : vector<256x1xi32>
      %24 = vector.broadcast %22 : i32 to vector<256x1xi32>
      %25 = arith.addi %24, %23 : vector<256x1xi32>
      %c16_i32_11 = arith.constant 16 : i32
      %26 = vector.broadcast %c16_i32_11 : i32 to vector<256x1xi32>
      %27 = arith.cmpi slt, %25, %26 : vector<256x1xi32>
      %cst = arith.constant 0.000000e+00 : f32
      %28 = vector.shape_cast %27 : vector<256x1xi1> to vector<256x1xi1>
      %29 = vector.broadcast %28 : vector<256x1xi1> to vector<256x128xi1>
      %30 = vector.broadcast %cst : f32 to vector<256x128xf32>
      %31 = arith.select %29, %19, %30 : vector<256x128xi1>, vector<256x128xf32>
      %cst_12 = arith.constant 0.000000e+00 : f32
      %32 = vector.shape_cast %27 : vector<256x1xi1> to vector<256x1xi1>
      %33 = vector.broadcast %32 : vector<256x1xi1> to vector<256x128xi1>
      %34 = vector.broadcast %cst_12 : f32 to vector<256x128xf32>
      %35 = arith.select %33, %21, %34 : vector<256x128xi1>, vector<256x128xf32>
      %c0_13 = arith.constant 0 : index
      %c0_14 = arith.constant 0 : index
      %36 = vector.load %arg4[%c0_13, %c0_14] : memref<8x128xf32, #tpu.memory_space<vmem>>, vector<8x128xf32>
      %37 = arith.mulf %31, %35 : vector<256x128xf32>
      %38 = vector.shape_cast %37 : vector<256x128xf32> to vector<32x8x128xf32>
      %cst_15 = arith.constant dense<0.000000e+00> : vector<8x128xf32>
      %39 = vector.multi_reduction <add>, %38, %cst_15 [0] : vector<32x8x128xf32> to vector<8x128xf32>
      %40 = arith.addf %36, %39 : vector<8x128xf32>
      %c0_16 = arith.constant 0 : index
      %c0_17 = arith.constant 0 : index
      %41 = vector.load %arg4[%c0_16, %c0_17] : memref<8x128xf32, #tpu.memory_space<vmem>>, vector<8x128xf32>
      tpu.vector_store %arg4[%c0_16, %c0_17], %40 {strides = array<i32>} : memref<8x128xf32, #tpu.memory_space<vmem>>, vector<8x128xf32>,
      %c0_18 = arith.constant 0 : index
      %c0_19 = arith.constant 0 : index
      %42 = vector.load %arg5[%c0_18, %c0_19] : memref<8x128xf32, #tpu.memory_space<vmem>>, vector<8x128xf32>
      %43 = arith.addf %31, %35 : vector<256x128xf32>
      %44 = vector.shape_cast %43 : vector<256x128xf32> to vector<32x8x128xf32>
      %cst_20 = arith.constant dense<0.000000e+00> : vector<8x128xf32>
      %45 = vector.multi_reduction <add>, %44, %cst_20 [0] : vector<32x8x128xf32> to vector<8x128xf32>
      %46 = arith.addf %42, %45 : vector<8x128xf32>
      %c0_21 = arith.constant 0 : index
      %c0_22 = arith.constant 0 : index
      %47 = vector.load %arg5[%c0_21, %c0_22] : memref<8x128xf32, #tpu.memory_space<vmem>>, vector<8x128xf32>
      tpu.vector_store %arg5[%c0_21, %c0_22], %46 {strides = array<i32>} : memref<8x128xf32, #tpu.memory_space<vmem>>, vector<8x128xf32>,
      %c1_i32_23 = arith.constant 1 : i32
    } else {
    }
    return
  }
  func.func @transform_0(%arg0: i32, %arg1: i32) -> (i32, i32) {
    %c1_i32 = arith.constant 1 : i32
    %0 = arith.muli %arg0, %c1_i32 : i32
    %1 = arith.addi %0, %arg1 : i32
    %c0_i32 = arith.constant 0 : i32
    %2 = arith.minsi %1, %c0_i32 : i32
    %c0_i32_0 = arith.constant 0 : i32
    %c0_i32_1 = arith.constant 0 : i32
    return %2, %c0_i32_0 : i32, i32
  }
  func.func @transform_1(%arg0: i32, %arg1: i32) -> (i32, i32) {
    %c1_i32 = arith.constant 1 : i32
    %0 = arith.muli %arg0, %c1_i32 : i32
    %1 = arith.addi %0, %arg1 : i32
    %c0_i32 = arith.constant 0 : i32
    %2 = arith.minsi %1, %c0_i32 : i32
    %c0_i32_0 = arith.constant 0 : i32
    %c0_i32_1 = arith.constant 0 : i32
    return %2, %c0_i32_0 : i32, i32
  }
  func.func @transform_2(%arg0: i32, %arg1: i32) -> (i32, i32) {
    %c0_i32 = arith.constant 0 : i32
    %c0_i32_0 = arith.constant 0 : i32
    return %arg0, %c0_i32 : i32, i32
  }
  func.func @transform_3(%arg0: i32, %arg1: i32) -> (i32, i32) {
    %c0_i32 = arith.constant 0 : i32
    %c0_i32_0 = arith.constant 0 : i32
    return %arg0, %c0_i32 : i32, i32
  }
}

</mosaic_0001>

<llo_original>
// kernel: iou_loss.1
$region0: #{iou_loss.1}
  #allocation0 [shape = 'u32[]', space=smem, size = 0x4, offset = 0x4, fixed_abs, tag = 'smem constant byte address 0x4 - core index']
  #allocation1 [shape = 'u32[144,128]{1,0:T(1,128)}', space=vmem, size = 0x12000, scoped, tag = 'internal scratch']
  %s0 = inlined_call_operand.vmem [shape: f32[16,128], index: 0, kind: input, shape index: {}]
  %s1 = inlined_call_operand.vmem [shape: f32[16,128], index: 1, kind: input, shape index: {}]
  %s2 = inlined_call_operand.vmem [shape: f32[8,128], index: 2, kind: output, shape index: {0}]
  %s3 = inlined_call_operand.vmem [shape: f32[8,128], index: 3, kind: output, shape index: {1}]
  %4 = xla_tuple %s2, %s3
  %s5 = sld [smem:[#allocation0]]
  $region38: #{iou_loss.1} parent=0
    _
  %s7 = ssub.s32 1, %s5
  %s8 = scalar_select 0, %s7, %s5
  // Predicated region
  $region2: #{iou_loss.1} parent=0 // pred_check
    _
  $region3: #{iou_loss.1} parent=0 // pred_check_branch
    %10 = sbr.rel (0) target = $region5
  $region4: #{iou_loss.1} parent=0 // pred_region
    %s11 = sadd.s32 0, 0
    %p12 = scmp.lt.s32.totalorder %s11, 0
    %s13 = scalar_select %p12, %s11, 0
    %s14 = smul.u32 32, %s13
    %s15 = ssub.s32 2, %s14
    %s16 = smul.u32 128, %s15
    %p17 = scmp.lt.s32.totalorder %s14, 1
    %s18 = scalar_select %p17, %s14, 1
    %s19 = smul.addr %s18, 8
    %s20 = scalar_lea.vmem %s0, %s19
    %s21 = sadd.s32 0, 0
    %p22 = scmp.lt.s32.totalorder %s21, 0
    %s23 = scalar_select %p22, %s21, 0
    %s24 = smul.u32 32, %s23
    %s25 = ssub.s32 2, %s24
    %s26 = smul.u32 128, %s25
  $region5: #{iou_loss.1} parent=0 // pred_fallthru
    _
  // Predicated region
  $region6: #{iou_loss.1} parent=0 // pred_check
    _
  $region7: #{iou_loss.1} parent=0 // pred_check_branch
    %28 = sbr.rel (0) target = $region9
  $region8: #{iou_loss.1} parent=0 // pred_region
    %s29 = sadd.s32 0, 0
    %p30 = scmp.lt.s32.totalorder %s29, 0
    %s31 = scalar_select %p30, %s29, 0
    %s32 = smul.u32 32, %s31
    %s33 = ssub.s32 2, %s32
    %s34 = smul.u32 128, %s33
    %p35 = scmp.lt.s32.totalorder %s32, 1
    %s36 = scalar_select %p35, %s32, 1
    %s37 = smul.addr %s36, 8
    %s38 = scalar_lea.vmem %s1, %s37
    %s39 = sadd.s32 0, 0
    %p40 = scmp.lt.s32.totalorder %s39, 0
    %s41 = scalar_select %p40, %s39, 0
    %s42 = smul.u32 32, %s41
    %s43 = ssub.s32 2, %s42
    %s44 = smul.u32 128, %s43
  $region9: #{iou_loss.1} parent=0 // pred_fallthru
    _
  %s45 = sadd.s32 0, 0
  %p46 = scmp.lt.s32.totalorder %s45, 0
  %s47 = scalar_select %p46, %s45, 0
  %s48 = smul.u32 32, %s47
  %s49 = ssub.s32 2, %s48
  %s50 = smul.u32 128, %s49
  %p51 = scmp.lt.s32.totalorder %s48, 1
  %s52 = scalar_select %p51, %s48, 1
  %s53 = smul.addr %s52, 8
  %s54 = scalar_lea.vmem %s0, %s53
  %s55 = sadd.s32 0, 0
  %p56 = scmp.lt.s32.totalorder %s55, 0
  %s57 = scalar_select %p56, %s55, 0
  %s58 = smul.u32 32, %s57
  %s59 = ssub.s32 2, %s58
  %s60 = smul.u32 128, %s59
  %p61 = scmp.lt.s32.totalorder %s58, 1
  %s62 = scalar_select %p61, %s58, 1
  %s63 = smul.addr %s62, 8
  %s64 = scalar_lea.vmem %s1, %s63
  %s65 = sadd.s32 0, 0
  %p66 = scmp.lt.s32.totalorder %s65, 0
  %s67 = scalar_select %p66, %s65, 0
  %s68 = smul.u32 32, %s67
  %s69 = ssub.s32 2, %s68
  %s70 = smul.u32 128, %s69
  %p71 = scmp.lt.s32.totalorder %s68, 1
  %s72 = scalar_select %p71, %s68, 1
  %s73 = smul.addr %s72, 8
  %s74 = scalar_lea.vmem %s0, %s73
  %s75 = sadd.s32 0, 0
  %p76 = scmp.lt.s32.totalorder %s75, 0
  %s77 = scalar_select %p76, %s75, 0
  %s78 = smul.u32 32, %s77
  %s79 = ssub.s32 2, %s78
  %s80 = smul.u32 128, %s79
  %s81 = sadd.s32 0, 0
  %p82 = scmp.lt.s32.totalorder %s81, 0
  %s83 = scalar_select %p82, %s81, 0
  %s84 = smul.u32 32, %s83
  %s85 = ssub.s32 2, %s84
  %s86 = smul.u32 128, %s85
  %p87 = scmp.lt.s32.totalorder %s84, 1
  %s88 = scalar_select %p87, %s84, 1
  %s89 = smul.addr %s88, 8
  %s90 = scalar_lea.vmem %s1, %s89
  %s91 = sadd.s32 0, 0
  %p92 = scmp.lt.s32.totalorder %s91, 0
  %s93 = scalar_select %p92, %s91, 0
  %s94 = smul.u32 32, %s93
  %s95 = ssub.s32 2, %s94
  %s96 = smul.u32 128, %s95
  %p97 = scmp.eq.s32.totalorder 0, 0
  // Predicated region
  $region10: #{iou_loss.1} parent=0 // pred_check
    %p98 = pneg %p97
  $region11: #{iou_loss.1} parent=0 // pred_check_branch
    %100 = sbr.rel (%p98) target = $region13
  $region12: #{iou_loss.1} parent=0 // pred_region
    %101 = vst [vmem:[%s2] sm:$0xff] 0.0
    %102 = vst [vmem:[%s3] sm:$0xff] 0.0
  $region13: #{iou_loss.1} parent=0 // pred_fallthru
    _
  %s103 = sadd.s32 0, 0
  %s104 = smul.u32 %s103, 256
  %s105 = sadd.s32 %s104, 256
  %p106 = scmp.le.s32.totalorder %s105, 16
  // Predicated region
  $region14: #{iou_loss.1} parent=0 // pred_check
    %p107 = pneg %p106
  $region15: #{iou_loss.1} parent=0 // pred_check_branch
    %109 = sbr.rel (%p107) target = $region17
  $region16: #{iou_loss.1} parent=0 // pred_region
    %v110 = vld [vmem:[%s74] sm:$0xff]
    %v111 = vld [vmem:[%s74 + $0x8] sm:$0xff]
    %v112 = vld [vmem:[%s74 + $0x10] sm:$0xff]
    %v113 = vld [vmem:[%s74 + $0x18] sm:$0xff]
    %v114 = vld [vmem:[%s74 + $0x20] sm:$0xff]
    %v115 = vld [vmem:[%s74 + $0x28] sm:$0xff]
    %v116 = vld [vmem:[%s74 + $0x30] sm:$0xff]
    %v117 = vld [vmem:[%s74 + $0x38] sm:$0xff]
    %v118 = vld [vmem:[%s74 + $0x40] sm:$0xff]
    %v119 = vld [vmem:[%s74 + $0x48] sm:$0xff]
    %v120 = vld [vmem:[%s74 + $0x50] sm:$0xff]
    %v121 = vld [vmem:[%s74 + $0x58] sm:$0xff]
    %v122 = vld [vmem:[%s74 + $0x60] sm:$0xff]
    %v123 = vld [vmem:[%s74 + $0x68] sm:$0xff]
    %v124 = vld [vmem:[%s74 + $0x70] sm:$0xff]
    %v125 = vld [vmem:[%s74 + $0x78] sm:$0xff]
    %v126 = vld [vmem:[%s74 + $0x80] sm:$0xff]
    %v127 = vld [vmem:[%s74 + $0x88] sm:$0xff]
    %v128 = vld [vmem:[%s74 + $0x90] sm:$0xff]
    %v129 = vld [vmem:[%s74 + $0x98] sm:$0xff]
    %v130 = vld [vmem:[%s74 + $0xa0] sm:$0xff]
    %v131 = vld [vmem:[%s74 + $0xa8] sm:$0xff]
    %v132 = vld [vmem:[%s74 + $0xb0] sm:$0xff]
    %v133 = vld [vmem:[%s74 + $0xb8] sm:$0xff]
    %v134 = vld [vmem:[%s74 + $0xc0] sm:$0xff]
    %v135 = vld [vmem:[%s74 + $0xc8] sm:$0xff]
    %v136 = vld [vmem:[%s74 + $0xd0] sm:$0xff]
    %v137 = vld [vmem:[%s74 + $0xd8] sm:$0xff]
    %v138 = vld [vmem:[%s74 + $0xe0] sm:$0xff]
    %v139 = vld [vmem:[%s74 + $0xe8] sm:$0xff]
    %v140 = vld [vmem:[%s74 + $0xf0] sm:$0xff]
    %v141 = vld [vmem:[%s74 + $0xf8] sm:$0xff]
    %v142 = vld [vmem:[%s90] sm:$0xff]
    %v143 = vld [vmem:[%s90 + $0x8] sm:$0xff]
    %v144 = vld [vmem:[%s90 + $0x10] sm:$0xff]
    %v145 = vld [vmem:[%s90 + $0x18] sm:$0xff]
    %v146 = vld [vmem:[%s90 + $0x20] sm:$0xff]
    %v147 = vld [vmem:[%s90 + $0x28] sm:$0xff]
    %v148 = vld [vmem:[%s90 + $0x30] sm:$0xff]
    %v149 = vld [vmem:[%s90 + $0x38] sm:$0xff]
    %v150 = vld [vmem:[%s90 + $0x40] sm:$0xff]
    %v151 = vld [vmem:[%s90 + $0x48] sm:$0xff]
    %v152 = vld [vmem:[%s90 + $0x50] sm:$0xff]
    %v153 = vld [vmem:[%s90 + $0x58] sm:$0xff]
    %v154 = vld [vmem:[%s90 + $0x60] sm:$0xff]
    %v155 = vld [vmem:[%s90 + $0x68] sm:$0xff]
    %v156 = vld [vmem:[%s90 + $0x70] sm:$0xff]
    %v157 = vld [vmem:[%s90 + $0x78] sm:$0xff]
    %v158 = vld [vmem:[%s90 + $0x80] sm:$0xff]
    %v159 = vld [vmem:[%s90 + $0x88] sm:$0xff]
    %v160 = vld [vmem:[%s90 + $0x90] sm:$0xff]
    %v161 = vld [vmem:[%s90 + $0x98] sm:$0xff]
    %v162 = vld [vmem:[%s90 + $0xa0] sm:$0xff]
    %v163 = vld [vmem:[%s90 + $0xa8] sm:$0xff]
    %v164 = vld [vmem:[%s90 + $0xb0] sm:$0xff]
    %v165 = vld [vmem:[%s90 + $0xb8] sm:$0xff]
    %v166 = vld [vmem:[%s90 + $0xc0] sm:$0xff]
    %v167 = vld [vmem:[%s90 + $0xc8] sm:$0xff]
    %v168 = vld [vmem:[%s90 + $0xd0] sm:$0xff]
    %v169 = vld [vmem:[%s90 + $0xd8] sm:$0xff]
    %v170 = vld [vmem:[%s90 + $0xe0] sm:$0xff]
    %v171 = vld [vmem:[%s90 + $0xe8] sm:$0xff]
    %v172 = vld [vmem:[%s90 + $0xf0] sm:$0xff]
    %v173 = vld [vmem:[%s90 + $0xf8] sm:$0xff]
    %v174 = vld [vmem:[%s2] sm:$0xff]
    %v175 = vmul.f32 %v110, %v142
    %v176 = vmul.f32 %v111, %v143
    %v177 = vmul.f32 %v112, %v144
    %v178 = vmul.f32 %v113, %v145
    %v179 = vmul.f32 %v114, %v146
    %v180 = vmul.f32 %v115, %v147
    %v181 = vmul.f32 %v116, %v148
    %v182 = vmul.f32 %v117, %v149
    %v183 = vmul.f32 %v118, %v150
    %v184 = vmul.f32 %v119, %v151
    %v185 = vmul.f32 %v120, %v152
    %v186 = vmul.f32 %v121, %v153
    %v187 = vmul.f32 %v122, %v154
    %v188 = vmul.f32 %v123, %v155
    %v189 = vmul.f32 %v124, %v156
    %v190 = vmul.f32 %v125, %v157
    %v191 = vmul.f32 %v126, %v158
    %v192 = vmul.f32 %v127, %v159
    %v193 = vmul.f32 %v128, %v160
    %v194 = vmul.f32 %v129, %v161
    %v195 = vmul.f32 %v130, %v162
    %v196 = vmul.f32 %v131, %v163
    %v197 = vmul.f32 %v132, %v164
    %v198 = vmul.f32 %v133, %v165
    %v199 = vmul.f32 %v134, %v166
    %v200 = vmul.f32 %v135, %v167
    %v201 = vmul.f32 %v136, %v168
    %v202 = vmul.f32 %v137, %v169
    %v203 = vmul.f32 %v138, %v170
    %v204 = vmul.f32 %v139, %v171
    %v205 = vmul.f32 %v140, %v172
    %v206 = vmul.f32 %v141, %v173
    %v207 = vadd.f32 %v175, %v176
    %v208 = vadd.f32 %v207, %v177
    %v209 = vadd.f32 %v208, %v178
    %v210 = vadd.f32 %v209, %v179
    %v211 = vadd.f32 %v210, %v180
    %v212 = vadd.f32 %v211, %v181
    %v213 = vadd.f32 %v212, %v182
    %v214 = vadd.f32 %v213, %v183
    %v215 = vadd.f32 %v214, %v184
    %v216 = vadd.f32 %v215, %v185
    %v217 = vadd.f32 %v216, %v186
    %v218 = vadd.f32 %v217, %v187
    %v219 = vadd.f32 %v218, %v188
    %v220 = vadd.f32 %v219, %v189
    %v221 = vadd.f32 %v220, %v190
    %v222 = vadd.f32 %v221, %v191
    %v223 = vadd.f32 %v222, %v192
    %v224 = vadd.f32 %v223, %v193
    %v225 = vadd.f32 %v224, %v194
    %v226 = vadd.f32 %v225, %v195
    %v227 = vadd.f32 %v226, %v196
    %v228 = vadd.f32 %v227, %v197
    %v229 = vadd.f32 %v228, %v198
    %v230 = vadd.f32 %v229, %v199
    %v231 = vadd.f32 %v230, %v200
    %v232 = vadd.f32 %v231, %v201
    %v233 = vadd.f32 %v232, %v202
    %v234 = vadd.f32 %v233, %v203
    %v235 = vadd.f32 %v234, %v204
    %v236 = vadd.f32 %v235, %v205
    %v237 = vadd.f32 %v236, %v206
    %v238 = vadd.f32 %v174, %v237
    %239 = vst [vmem:[%s2] sm:$0xff] %v238
    %v240 = vld [vmem:[%s3] sm:$0xff]
    %v241 = vadd.f32 %v110, %v142
    %v242 = vadd.f32 %v111, %v143
    %v243 = vadd.f32 %v112, %v144
    %v244 = vadd.f32 %v113, %v145
    %v245 = vadd.f32 %v114, %v146
    %v246 = vadd.f32 %v115, %v147
    %v247 = vadd.f32 %v116, %v148
    %v248 = vadd.f32 %v117, %v149
    %v249 = vadd.f32 %v118, %v150
    %v250 = vadd.f32 %v119, %v151
    %v251 = vadd.f32 %v120, %v152
    %v252 = vadd.f32 %v121, %v153
    %v253 = vadd.f32 %v122, %v154
    %v254 = vadd.f32 %v123, %v155
    %v255 = vadd.f32 %v124, %v156
    %v256 = vadd.f32 %v125, %v157
    %v257 = vadd.f32 %v126, %v158
    %v258 = vadd.f32 %v127, %v159
    %v259 = vadd.f32 %v128, %v160
    %v260 = vadd.f32 %v129, %v161
    %v261 = vadd.f32 %v130, %v162
    %v262 = vadd.f32 %v131, %v163
    %v263 = vadd.f32 %v132, %v164
    %v264 = vadd.f32 %v133, %v165
    %v265 = vadd.f32 %v134, %v166
    %v266 = vadd.f32 %v135, %v167
    %v267 = vadd.f32 %v136, %v168
    %v268 = vadd.f32 %v137, %v169
    %v269 = vadd.f32 %v138, %v170
    %v270 = vadd.f32 %v139, %v171
    %v271 = vadd.f32 %v140, %v172
    %v272 = vadd.f32 %v141, %v173
    %v273 = vadd.f32 %v241, %v242
    %v274 = vadd.f32 %v273, %v243
    %v275 = vadd.f32 %v274, %v244
    %v276 = vadd.f32 %v275, %v245
    %v277 = vadd.f32 %v276, %v246
    %v278 = vadd.f32 %v277, %v247
    %v279 = vadd.f32 %v278, %v248
    %v280 = vadd.f32 %v279, %v249
    %v281 = vadd.f32 %v280, %v250
    %v282 = vadd.f32 %v281, %v251
    %v283 = vadd.f32 %v282, %v252
    %v284 = vadd.f32 %v283, %v253
    %v285 = vadd.f32 %v284, %v254
    %v286 = vadd.f32 %v285, %v255
    %v287 = vadd.f32 %v286, %v256
    %v288 = vadd.f32 %v287, %v257
    %v289 = vadd.f32 %v288, %v258
    %v290 = vadd.f32 %v289, %v259
    %v291 = vadd.f32 %v290, %v260
    %v292 = vadd.f32 %v291, %v261
    %v293 = vadd.f32 %v292, %v262
    %v294 = vadd.f32 %v293, %v263
    %v295 = vadd.f32 %v294, %v264
    %v296 = vadd.f32 %v295, %v265
    %v297 = vadd.f32 %v296, %v266
    %v298 = vadd.f32 %v297, %v267
    %v299 = vadd.f32 %v298, %v268
    %v300 = vadd.f32 %v299, %v269
    %v301 = vadd.f32 %v300, %v270
    %v302 = vadd.f32 %v301, %v271
    %v303 = vadd.f32 %v302, %v272
    %v304 = vadd.f32 %v240, %v303
    %305 = vst [vmem:[%s3] sm:$0xff] %v304
  $region17: #{iou_loss.1} parent=0 // pred_fallthru
    _
  %p306 = scmp.gt.s32.totalorder %s105, 16
  // Predicated region
  $region18: #{iou_loss.1} parent=0 // pred_check
    %p307 = pneg %p306
  $region19: #{iou_loss.1} parent=0 // pred_check_branch
    %309 = sbr.rel (%p307) target = $region21
  $region20: #{iou_loss.1} parent=0 // pred_region
    %v310 = vld [vmem:[%s74] sm:$0xff]
    %v311 = vld [vmem:[%s74 + $0x8] sm:$0xff]
    %v312 = vld [vmem:[%s74 + $0x10] sm:$0xff]
    %v313 = vld [vmem:[%s74 + $0x18] sm:$0xff]
    %v314 = vld [vmem:[%s74 + $0x20] sm:$0xff]
    %v315 = vld [vmem:[%s74 + $0x28] sm:$0xff]
    %v316 = vld [vmem:[%s74 + $0x30] sm:$0xff]
    %v317 = vld [vmem:[%s74 + $0x38] sm:$0xff]
    %v318 = vld [vmem:[%s74 + $0x40] sm:$0xff]
    %v319 = vld [vmem:[%s74 + $0x48] sm:$0xff]
    %v320 = vld [vmem:[%s74 + $0x50] sm:$0xff]
    %v321 = vld [vmem:[%s74 + $0x58] sm:$0xff]
    %v322 = vld [vmem:[%s74 + $0x60] sm:$0xff]
    %v323 = vld [vmem:[%s74 + $0x68] sm:$0xff]
    %v324 = vld [vmem:[%s74 + $0x70] sm:$0xff]
    %v325 = vld [vmem:[%s74 + $0x78] sm:$0xff]
    %v326 = vld [vmem:[%s74 + $0x80] sm:$0xff]
    %v327 = vld [vmem:[%s74 + $0x88] sm:$0xff]
    %v328 = vld [vmem:[%s74 + $0x90] sm:$0xff]
    %v329 = vld [vmem:[%s74 + $0x98] sm:$0xff]
    %v330 = vld [vmem:[%s74 + $0xa0] sm:$0xff]
    %v331 = vld [vmem:[%s74 + $0xa8] sm:$0xff]
    %v332 = vld [vmem:[%s74 + $0xb0] sm:$0xff]
    %v333 = vld [vmem:[%s74 + $0xb8] sm:$0xff]
    %v334 = vld [vmem:[%s74 + $0xc0] sm:$0xff]
    %v335 = vld [vmem:[%s74 + $0xc8] sm:$0xff]
    %v336 = vld [vmem:[%s74 + $0xd0] sm:$0xff]
    %v337 = vld [vmem:[%s74 + $0xd8] sm:$0xff]
    %v338 = vld [vmem:[%s74 + $0xe0] sm:$0xff]
    %v339 = vld [vmem:[%s74 + $0xe8] sm:$0xff]
    %v340 = vld [vmem:[%s74 + $0xf0] sm:$0xff]
    %v341 = vld [vmem:[%s74 + $0xf8] sm:$0xff]
    %v342 = vld [vmem:[%s90] sm:$0xff]
    %v343 = vld [vmem:[%s90 + $0x8] sm:$0xff]
    %v344 = vld [vmem:[%s90 + $0x10] sm:$0xff]
    %v345 = vld [vmem:[%s90 + $0x18] sm:$0xff]
    %v346 = vld [vmem:[%s90 + $0x20] sm:$0xff]
    %v347 = vld [vmem:[%s90 + $0x28] sm:$0xff]
    %v348 = vld [vmem:[%s90 + $0x30] sm:$0xff]
    %v349 = vld [vmem:[%s90 + $0x38] sm:$0xff]
    %v350 = vld [vmem:[%s90 + $0x40] sm:$0xff]
    %v351 = vld [vmem:[%s90 + $0x48] sm:$0xff]
    %v352 = vld [vmem:[%s90 + $0x50] sm:$0xff]
    %v353 = vld [vmem:[%s90 + $0x58] sm:$0xff]
    %v354 = vld [vmem:[%s90 + $0x60] sm:$0xff]
    %v355 = vld [vmem:[%s90 + $0x68] sm:$0xff]
    %v356 = vld [vmem:[%s90 + $0x70] sm:$0xff]
    %v357 = vld [vmem:[%s90 + $0x78] sm:$0xff]
    %v358 = vld [vmem:[%s90 + $0x80] sm:$0xff]
    %v359 = vld [vmem:[%s90 + $0x88] sm:$0xff]
    %v360 = vld [vmem:[%s90 + $0x90] sm:$0xff]
    %v361 = vld [vmem:[%s90 + $0x98] sm:$0xff]
    %v362 = vld [vmem:[%s90 + $0xa0] sm:$0xff]
    %v363 = vld [vmem:[%s90 + $0xa8] sm:$0xff]
    %v364 = vld [vmem:[%s90 + $0xb0] sm:$0xff]
    %v365 = vld [vmem:[%s90 + $0xb8] sm:$0xff]
    %v366 = vld [vmem:[%s90 + $0xc0] sm:$0xff]
    %v367 = vld [vmem:[%s90 + $0xc8] sm:$0xff]
    %v368 = vld [vmem:[%s90 + $0xd0] sm:$0xff]
    %v369 = vld [vmem:[%s90 + $0xd8] sm:$0xff]
    %v370 = vld [vmem:[%s90 + $0xe0] sm:$0xff]
    %v371 = vld [vmem:[%s90 + $0xe8] sm:$0xff]
    %v372 = vld [vmem:[%s90 + $0xf0] sm:$0xff]
    %v373 = vld [vmem:[%s90 + $0xf8] sm:$0xff]
    %s374 = sadd.s32 %s104, 0
    %v375 = vlaneseq
    %v376 = vshrl.u32 %v375, 7
    %v377 = vadd.s32 %v376, 8
    %v378 = vadd.s32 %v376, 16
    %v379 = vadd.s32 %v376, 24
    %v380 = vadd.s32 %v376, 32
    %v381 = vadd.s32 %v376, 40
    %v382 = vadd.s32 %v376, 48
    %v383 = vadd.s32 %v376, 56
    %v384 = vadd.s32 %v376, 64
    %v385 = vadd.s32 %v376, 72
    %v386 = vadd.s32 %v376, 80
    %v387 = vadd.s32 %v376, 88
    %v388 = vadd.s32 %v376, 96
    %v389 = vadd.s32 %v376, 104
    %v390 = vadd.s32 %v376, 112
    %v391 = vadd.s32 %v376, 120
    %v392 = vadd.s32 %v376, 128
    %v393 = vadd.s32 %v376, 136
    %v394 = vadd.s32 %v376, 144
    %v395 = vadd.s32 %v376, 152
    %v396 = vadd.s32 %v376, 160
    %v397 = vadd.s32 %v376, 168
    %v398 = vadd.s32 %v376, 176
    %v399 = vadd.s32 %v376, 184
    %v400 = vadd.s32 %v376, 192
    %v401 = vadd.s32 %v376, 200
    %v402 = vadd.s32 %v376, 208
    %v403 = vadd.s32 %v376, 216
    %v404 = vadd.s32 %v376, 224
    %v405 = vadd.s32 %v376, 232
    %v406 = vadd.s32 %v376, 240
    %v407 = vadd.s32 %v376, 248
    %v408 = vstv %s374
    %v409 = vadd.s32 %v408, %v376
    %v410 = vadd.s32 %v408, %v377
    %v411 = vadd.s32 %v408, %v378
    %v412 = vadd.s32 %v408, %v379
    %v413 = vadd.s32 %v408, %v380
    %v414 = vadd.s32 %v408, %v381
    %v415 = vadd.s32 %v408, %v382
    %v416 = vadd.s32 %v408, %v383
    %v417 = vadd.s32 %v408, %v384
    %v418 = vadd.s32 %v408, %v385
    %v419 = vadd.s32 %v408, %v386
    %v420 = vadd.s32 %v408, %v387
    %v421 = vadd.s32 %v408, %v388
    %v422 = vadd.s32 %v408, %v389
    %v423 = vadd.s32 %v408, %v390
    %v424 = vadd.s32 %v408, %v391
    %v425 = vadd.s32 %v408, %v392
    %v426 = vadd.s32 %v408, %v393
    %v427 = vadd.s32 %v408, %v394
    %v428 = vadd.s32 %v408, %v395
    %v429 = vadd.s32 %v408, %v396
    %v430 = vadd.s32 %v408, %v397
    %v431 = vadd.s32 %v408, %v398
    %v432 = vadd.s32 %v408, %v399
    %v433 = vadd.s32 %v408, %v400
    %v434 = vadd.s32 %v408, %v401
    %v435 = vadd.s32 %v408, %v402
    %v436 = vadd.s32 %v408, %v403
    %v437 = vadd.s32 %v408, %v404
    %v438 = vadd.s32 %v408, %v405
    %v439 = vadd.s32 %v408, %v406
    %v440 = vadd.s32 %v408, %v407
    %vm441 = vcmp.lt.s32.totalorder %v409, 16
    %vm442 = vcmp.lt.s32.totalorder %v410, 16
    %vm443 = vcmp.lt.s32.totalorder %v411, 16
    %vm444 = vcmp.lt.s32.totalorder %v412, 16
    %vm445 = vcmp.lt.s32.totalorder %v413, 16
    %vm446 = vcmp.lt.s32.totalorder %v414, 16
    %vm447 = vcmp.lt.s32.totalorder %v415, 16
    %vm448 = vcmp.lt.s32.totalorder %v416, 16
    %vm449 = vcmp.lt.s32.totalorder %v417, 16
    %vm450 = vcmp.lt.s32.totalorder %v418, 16
    %vm451 = vcmp.lt.s32.totalorder %v419, 16
    %vm452 = vcmp.lt.s32.totalorder %v420, 16
    %vm453 = vcmp.lt.s32.totalorder %v421, 16
    %vm454 = vcmp.lt.s32.totalorder %v422, 16
    %vm455 = vcmp.lt.s32.totalorder %v423, 16
    %vm456 = vcmp.lt.s32.totalorder %v424, 16
    %vm457 = vcmp.lt.s32.totalorder %v425, 16
    %vm458 = vcmp.lt.s32.totalorder %v426, 16
    %vm459 = vcmp.lt.s32.totalorder %v427, 16
    %vm460 = vcmp.lt.s32.totalorder %v428, 16
    %vm461 = vcmp.lt.s32.totalorder %v429, 16
    %vm462 = vcmp.lt.s32.totalorder %v430, 16
    %vm463 = vcmp.lt.s32.totalorder %v431, 16
    %vm464 = vcmp.lt.s32.totalorder %v432, 16
    %vm465 = vcmp.lt.s32.totalorder %v433, 16
    %vm466 = vcmp.lt.s32.totalorder %v434, 16
    %vm467 = vcmp.lt.s32.totalorder %v435, 16
    %vm468 = vcmp.lt.s32.totalorder %v436, 16
    %vm469 = vcmp.lt.s32.totalorder %v437, 16
    %vm470 = vcmp.lt.s32.totalorder %v438, 16
    %vm471 = vcmp.lt.s32.totalorder %v439, 16
    %vm472 = vcmp.lt.s32.totalorder %v440, 16
    %v473 = vsel %vm441, 1, 0
    %v474 = vsel %vm442, 1, 0
    %v475 = vsel %vm443, 1, 0
    %v476 = vsel %vm444, 1, 0
    %v477 = vsel %vm445, 1, 0
    %v478 = vsel %vm446, 1, 0
    %v479 = vsel %vm447, 1, 0
    %v480 = vsel %vm448, 1, 0
    %v481 = vsel %vm449, 1, 0
    %v482 = vsel %vm450, 1, 0
    %v483 = vsel %vm451, 1, 0
    %v484 = vsel %vm452, 1, 0
    %v485 = vsel %vm453, 1, 0
    %v486 = vsel %vm454, 1, 0
    %v487 = vsel %vm455, 1, 0
    %v488 = vsel %vm456, 1, 0
    %v489 = vsel %vm457, 1, 0
    %v490 = vsel %vm458, 1, 0
    %v491 = vsel %vm459, 1, 0
    %v492 = vsel %vm460, 1, 0
    %v493 = vsel %vm461, 1, 0
    %v494 = vsel %vm462, 1, 0
    %v495 = vsel %vm463, 1, 0
    %v496 = vsel %vm464, 1, 0
    %v497 = vsel %vm465, 1, 0
    %v498 = vsel %vm466, 1, 0
    %v499 = vsel %vm467, 1, 0
    %v500 = vsel %vm468, 1, 0
    %v501 = vsel %vm469, 1, 0
    %v502 = vsel %vm470, 1, 0
    %v503 = vsel %vm471, 1, 0
    %v504 = vsel %vm472, 1, 0
    %vm505 = vcmp.eq.s32.totalorder %v473, 1
    %vm506 = vcmp.eq.s32.totalorder %v474, 1
    %vm507 = vcmp.eq.s32.totalorder %v475, 1
    %vm508 = vcmp.eq.s32.totalorder %v476, 1
    %vm509 = vcmp.eq.s32.totalorder %v477, 1
    %vm510 = vcmp.eq.s32.totalorder %v478, 1
    %vm511 = vcmp.eq.s32.totalorder %v479, 1
    %vm512 = vcmp.eq.s32.totalorder %v480, 1
    %vm513 = vcmp.eq.s32.totalorder %v481, 1
    %vm514 = vcmp.eq.s32.totalorder %v482, 1
    %vm515 = vcmp.eq.s32.totalorder %v483, 1
    %vm516 = vcmp.eq.s32.totalorder %v484, 1
    %vm517 = vcmp.eq.s32.totalorder %v485, 1
    %vm518 = vcmp.eq.s32.totalorder %v486, 1
    %vm519 = vcmp.eq.s32.totalorder %v487, 1
    %vm520 = vcmp.eq.s32.totalorder %v488, 1
    %vm521 = vcmp.eq.s32.totalorder %v489, 1
    %vm522 = vcmp.eq.s32.totalorder %v490, 1
    %vm523 = vcmp.eq.s32.totalorder %v491, 1
    %vm524 = vcmp.eq.s32.totalorder %v492, 1
    %vm525 = vcmp.eq.s32.totalorder %v493, 1
    %vm526 = vcmp.eq.s32.totalorder %v494, 1
    %vm527 = vcmp.eq.s32.totalorder %v495, 1
    %vm528 = vcmp.eq.s32.totalorder %v496, 1
    %vm529 = vcmp.eq.s32.totalorder %v497, 1
    %vm530 = vcmp.eq.s32.totalorder %v498, 1
    %vm531 = vcmp.eq.s32.totalorder %v499, 1
    %vm532 = vcmp.eq.s32.totalorder %v500, 1
    %vm533 = vcmp.eq.s32.totalorder %v501, 1
    %vm534 = vcmp.eq.s32.totalorder %v502, 1
    %vm535 = vcmp.eq.s32.totalorder %v503, 1
    %vm536 = vcmp.eq.s32.totalorder %v504, 1
    %v537 = vsel %vm505, %v310, 0.0
    %v538 = vsel %vm506, %v311, 0.0
    %v539 = vsel %vm507, %v312, 0.0
    %v540 = vsel %vm508, %v313, 0.0
    %v541 = vsel %vm509, %v314, 0.0
    %v542 = vsel %vm510, %v315, 0.0
    %v543 = vsel %vm511, %v316, 0.0
    %v544 = vsel %vm512, %v317, 0.0
    %v545 = vsel %vm513, %v318, 0.0
    %v546 = vsel %vm514, %v319, 0.0
    %v547 = vsel %vm515, %v320, 0.0
    %v548 = vsel %vm516, %v321, 0.0
    %v549 = vsel %vm517, %v322, 0.0
    %v550 = vsel %vm518, %v323, 0.0
    %v551 = vsel %vm519, %v324, 0.0
    %v552 = vsel %vm520, %v325, 0.0
    %v553 = vsel %vm521, %v326, 0.0
    %v554 = vsel %vm522, %v327, 0.0
    %v555 = vsel %vm523, %v328, 0.0
    %v556 = vsel %vm524, %v329, 0.0
    %v557 = vsel %vm525, %v330, 0.0
    %v558 = vsel %vm526, %v331, 0.0
    %v559 = vsel %vm527, %v332, 0.0
    %v560 = vsel %vm528, %v333, 0.0
    %v561 = vsel %vm529, %v334, 0.0
    %v562 = vsel %vm530, %v335, 0.0
    %v563 = vsel %vm531, %v336, 0.0
    %v564 = vsel %vm532, %v337, 0.0
    %v565 = vsel %vm533, %v338, 0.0
    %v566 = vsel %vm534, %v339, 0.0
    %v567 = vsel %vm535, %v340, 0.0
    %v568 = vsel %vm536, %v341, 0.0
    %v569 = vsel %vm505, %v342, 0.0
    %v570 = vsel %vm506, %v343, 0.0
    %v571 = vsel %vm507, %v344, 0.0
    %v572 = vsel %vm508, %v345, 0.0
    %v573 = vsel %vm509, %v346, 0.0
    %v574 = vsel %vm510, %v347, 0.0
    %v575 = vsel %vm511, %v348, 0.0
    %v576 = vsel %vm512, %v349, 0.0
    %v577 = vsel %vm513, %v350, 0.0
    %v578 = vsel %vm514, %v351, 0.0
    %v579 = vsel %vm515, %v352, 0.0
    %v580 = vsel %vm516, %v353, 0.0
    %v581 = vsel %vm517, %v354, 0.0
    %v582 = vsel %vm518, %v355, 0.0
    %v583 = vsel %vm519, %v356, 0.0
    %v584 = vsel %vm520, %v357, 0.0
    %v585 = vsel %vm521, %v358, 0.0
    %v586 = vsel %vm522, %v359, 0.0
    %v587 = vsel %vm523, %v360, 0.0
    %v588 = vsel %vm524, %v361, 0.0
    %v589 = vsel %vm525, %v362, 0.0
    %v590 = vsel %vm526, %v363, 0.0
    %v591 = vsel %vm527, %v364, 0.0
    %v592 = vsel %vm528, %v365, 0.0
    %v593 = vsel %vm529, %v366, 0.0
    %v594 = vsel %vm530, %v367, 0.0
    %v595 = vsel %vm531, %v368, 0.0
    %v596 = vsel %vm532, %v369, 0.0
    %v597 = vsel %vm533, %v370, 0.0
    %v598 = vsel %vm534, %v371, 0.0
    %v599 = vsel %vm535, %v372, 0.0
    %v600 = vsel %vm536, %v373, 0.0
    %v601 = vld [vmem:[%s2] sm:$0xff]
    %v602 = vmul.f32 %v537, %v569
    %v603 = vmul.f32 %v538, %v570
    %v604 = vmul.f32 %v539, %v571
    %v605 = vmul.f32 %v540, %v572
    %v606 = vmul.f32 %v541, %v573
    %v607 = vmul.f32 %v542, %v574
    %v608 = vmul.f32 %v543, %v575
    %v609 = vmul.f32 %v544, %v576
    %v610 = vmul.f32 %v545, %v577
    %v611 = vmul.f32 %v546, %v578
    %v612 = vmul.f32 %v547, %v579
    %v613 = vmul.f32 %v548, %v580
    %v614 = vmul.f32 %v549, %v581
    %v615 = vmul.f32 %v550, %v582
    %v616 = vmul.f32 %v551, %v583
    %v617 = vmul.f32 %v552, %v584
    %v618 = vmul.f32 %v553, %v585
    %v619 = vmul.f32 %v554, %v586
    %v620 = vmul.f32 %v555, %v587
    %v621 = vmul.f32 %v556, %v588
    %v622 = vmul.f32 %v557, %v589
    %v623 = vmul.f32 %v558, %v590
    %v624 = vmul.f32 %v559, %v591
    %v625 = vmul.f32 %v560, %v592
    %v626 = vmul.f32 %v561, %v593
    %v627 = vmul.f32 %v562, %v594
    %v628 = vmul.f32 %v563, %v595
    %v629 = vmul.f32 %v564, %v596
    %v630 = vmul.f32 %v565, %v597
    %v631 = vmul.f32 %v566, %v598
    %v632 = vmul.f32 %v567, %v599
    %v633 = vmul.f32 %v568, %v600
    %v634 = vadd.f32 %v602, %v603
    %v635 = vadd.f32 %v634, %v604
    %v636 = vadd.f32 %v635, %v605
    %v637 = vadd.f32 %v636, %v606
    %v638 = vadd.f32 %v637, %v607
    %v639 = vadd.f32 %v638, %v608
    %v640 = vadd.f32 %v639, %v609
    %v641 = vadd.f32 %v640, %v610
    %v642 = vadd.f32 %v641, %v611
    %v643 = vadd.f32 %v642, %v612
    %v644 = vadd.f32 %v643, %v613
    %v645 = vadd.f32 %v644, %v614
    %v646 = vadd.f32 %v645, %v615
    %v647 = vadd.f32 %v646, %v616
    %v648 = vadd.f32 %v647, %v617
    %v649 = vadd.f32 %v648, %v618
    %v650 = vadd.f32 %v649, %v619
    %v651 = vadd.f32 %v650, %v620
    %v652 = vadd.f32 %v651, %v621
    %v653 = vadd.f32 %v652, %v622
    %v654 = vadd.f32 %v653, %v623
    %v655 = vadd.f32 %v654, %v624
    %v656 = vadd.f32 %v655, %v625
    %v657 = vadd.f32 %v656, %v626
    %v658 = vadd.f32 %v657, %v627
    %v659 = vadd.f32 %v658, %v628
    %v660 = vadd.f32 %v659, %v629
    %v661 = vadd.f32 %v660, %v630
    %v662 = vadd.f32 %v661, %v631
    %v663 = vadd.f32 %v662, %v632
    %v664 = vadd.f32 %v663, %v633
    %v665 = vadd.f32 %v601, %v664
    %666 = vst [vmem:[%s2] sm:$0xff] %v665
    %v667 = vld [vmem:[%s3] sm:$0xff]
    %v668 = vadd.f32 %v537, %v569
    %v669 = vadd.f32 %v538, %v570
    %v670 = vadd.f32 %v539, %v571
    %v671 = vadd.f32 %v540, %v572
    %v672 = vadd.f32 %v541, %v573
    %v673 = vadd.f32 %v542, %v574
    %v674 = vadd.f32 %v543, %v575
    %v675 = vadd.f32 %v544, %v576
    %v676 = vadd.f32 %v545, %v577
    %v677 = vadd.f32 %v546, %v578
    %v678 = vadd.f32 %v547, %v579
    %v679 = vadd.f32 %v548, %v580
    %v680 = vadd.f32 %v549, %v581
    %v681 = vadd.f32 %v550, %v582
    %v682 = vadd.f32 %v551, %v583
    %v683 = vadd.f32 %v552, %v584
    %v684 = vadd.f32 %v553, %v585
    %v685 = vadd.f32 %v554, %v586
    %v686 = vadd.f32 %v555, %v587
    %v687 = vadd.f32 %v556, %v588
    %v688 = vadd.f32 %v557, %v589
    %v689 = vadd.f32 %v558, %v590
    %v690 = vadd.f32 %v559, %v591
    %v691 = vadd.f32 %v560, %v592
    %v692 = vadd.f32 %v561, %v593
    %v693 = vadd.f32 %v562, %v594
    %v694 = vadd.f32 %v563, %v595
    %v695 = vadd.f32 %v564, %v596
    %v696 = vadd.f32 %v565, %v597
    %v697 = vadd.f32 %v566, %v598
    %v698 = vadd.f32 %v567, %v599
    %v699 = vadd.f32 %v568, %v600
    %v700 = vadd.f32 %v668, %v669
    %v701 = vadd.f32 %v700, %v670
    %v702 = vadd.f32 %v701, %v671
    %v703 = vadd.f32 %v702, %v672
    %v704 = vadd.f32 %v703, %v673
    %v705 = vadd.f32 %v704, %v674
    %v706 = vadd.f32 %v705, %v675
    %v707 = vadd.f32 %v706, %v676
    %v708 = vadd.f32 %v707, %v677
    %v709 = vadd.f32 %v708, %v678
    %v710 = vadd.f32 %v709, %v679
    %v711 = vadd.f32 %v710, %v680
    %v712 = vadd.f32 %v711, %v681
    %v713 = vadd.f32 %v712, %v682
    %v714 = vadd.f32 %v713, %v683
    %v715 = vadd.f32 %v714, %v684
    %v716 = vadd.f32 %v715, %v685
    %v717 = vadd.f32 %v716, %v686
    %v718 = vadd.f32 %v717, %v687
    %v719 = vadd.f32 %v718, %v688
    %v720 = vadd.f32 %v719, %v689
    %v721 = vadd.f32 %v720, %v690
    %v722 = vadd.f32 %v721, %v691
    %v723 = vadd.f32 %v722, %v692
    %v724 = vadd.f32 %v723, %v693
    %v725 = vadd.f32 %v724, %v694
    %v726 = vadd.f32 %v725, %v695
    %v727 = vadd.f32 %v726, %v696
    %v728 = vadd.f32 %v727, %v697
    %v729 = vadd.f32 %v728, %v698
    %v730 = vadd.f32 %v729, %v699
    %v731 = vadd.f32 %v667, %v730
    %732 = vst [vmem:[%s3] sm:$0xff] %v731
  $region21: #{iou_loss.1} parent=0 // pred_fallthru
    _
  // Predicated region
  $region22: #{iou_loss.1} parent=0 // pred_check
    _
  $region23: #{iou_loss.1} parent=0 // pred_check_branch
    %734 = sbr.rel (0) target = $region25
  $region24: #{iou_loss.1} parent=0 // pred_region
    _
  $region25: #{iou_loss.1} parent=0 // pred_fallthru
    _
  // Predicated region
  $region26: #{iou_loss.1} parent=0 // pred_check
    _
  $region27: #{iou_loss.1} parent=0 // pred_check_branch
    %736 = sbr.rel (0) target = $region29
  $region28: #{iou_loss.1} parent=0 // pred_region
    _
  $region29: #{iou_loss.1} parent=0 // pred_fallthru
    _
  // Predicated region
  $region30: #{iou_loss.1} parent=0 // pred_check
    _
  $region31: #{iou_loss.1} parent=0 // pred_check_branch
    %738 = sbr.rel (0) target = $region33
  $region32: #{iou_loss.1} parent=0 // pred_region
    _
  $region33: #{iou_loss.1} parent=0 // pred_fallthru
    _
  // Predicated region
  $region34: #{iou_loss.1} parent=0 // pred_check
    _
  $region35: #{iou_loss.1} parent=0 // pred_check_branch
    %740 = sbr.rel (0) target = $region37
  $region36: #{iou_loss.1} parent=0 // pred_region
    _
  $region37: #{iou_loss.1} parent=0 // pred_fallthru
    _

</llo_original>
